<compile_context>
chip_gen: v5e
topology: v5e:2x2
jax: 0.10.0
libtpu: 0.0.40
codegen_flags: <defaults>
</compile_context>

<pallas_src>
import functools

import jax
import jax.numpy as jnp
from jax.experimental import pallas as pl
from jax.experimental.pallas import tpu as pltpu


# ----------------------------------------------------------------------------
# Kernels
# ----------------------------------------------------------------------------
def _vi_norm_kernel(h_ref, noise_ref, w_ref, b_ref, out_ref, *, out_dim):
    # Single fused matmul: [tm, in] @ [in, 2*out] -> mean | logstd
    h = h_ref[...].astype(jnp.bfloat16)
    fused = jnp.dot(h, w_ref[...], preferred_element_type=jnp.float32) + b_ref[...]
    mean = fused[:, :out_dim]
    logstd = fused[:, out_dim:]
    n = noise_ref[...] * jnp.exp(logstd) + mean
    # Lane-dense packed output slab: [N | mean | logstd]
    out_ref[...] = jnp.concatenate([n, mean, logstd], axis=-1)


def _vi_both_kernel(h_ref, noise_ref, unif_ref, w_ref, b_ref, out_ref,
                    *, inv_temp, out_dim, cat, dd):
    # Single fused matmul: [tm, in] @ [in, 2*out+cat] -> mean | logstd | q
    h = h_ref[...].astype(jnp.bfloat16)
    fused = jnp.dot(h, w_ref[...], preferred_element_type=jnp.float32) + b_ref[...]
    mean = fused[:, :out_dim]
    logstd = fused[:, out_dim:2 * out_dim]
    q = fused[:, 2 * out_dim:2 * out_dim + cat]

    # Reparameterized gaussian sample
    n = noise_ref[...] * jnp.exp(logstd) + mean                 # [tm, out_dim]

    # Gumbel-softmax over the categorical dim (softmax denom via EUP reciprocal)
    eps = 1e-07
    u = unif_ref[...]
    gumbel = -jnp.log(-jnp.log(u + eps) + eps)
    logits = (q + gumbel) * inv_temp
    logits = logits - jnp.max(logits, axis=-1, keepdims=True)
    ez = jnp.exp(logits)
    z = ez * pl.reciprocal(jnp.sum(ez, axis=-1, keepdims=True), approx=True)

    # M[p, d] = sum_c z[p, c] * n[p, c*dd + d]   (cat is small & static)
    # TODO(synk): for large cat/dd, lane-align the per-category segments so this
    # stays pure VPU work instead of sub-vreg lane slices.
    acc = jnp.zeros((h_ref.shape[0], dd), jnp.float32)
    for c in range(cat):
        acc = acc + z[:, c:c + 1] * n[:, c * dd:(c + 1) * dd]

    # Lane-dense packed output slab: [mean | logstd | q | M]
    out_ref[...] = jnp.concatenate([mean, logstd, q, acc], axis=-1)


# ----------------------------------------------------------------------------
# Tiling plan
# ----------------------------------------------------------------------------
def _plan_rows(P, tm):
    """Pick a row-tile size: multiple of 8, capped so the grid keeps >= 2
    parallel steps when possible (v7x has 2 TensorCores)."""
    if P >= 16:
        tm = min(tm, pl.cdiv(P, 2))
    tm = max(8, ((min(tm, P) + 7) // 8) * 8)
    grid = pl.cdiv(P, tm)
    return tm, grid, grid * tm


_COMPILER_PARAMS = pltpu.CompilerParams(
    dimension_semantics=("parallel",),
    vmem_limit_bytes=32 * 1024 * 1024,   # explicit: safe on v7x's 64 MiB VMEM
)


# ----------------------------------------------------------------------------
# Wrappers (jitted so weight concat/transpose/cast fuse into the call)
# ----------------------------------------------------------------------------
@functools.partial(jax.jit, static_argnames=("tm",))
def vi_forward_norm(H, noise, params, *, tm=256):
    P, in_dim = H.shape
    out_dim = params["Wm"].shape[0]
    n_fused = 2 * out_dim           # matmul output width (mean | logstd)
    n_out = 3 * out_dim             # packed output slab  (N | mean | logstd)

    w_fused = jnp.concatenate([params["Wm"].T, params["Ws"].T],
                              axis=1).astype(jnp.bfloat16)            # [in, 2*out]
    b_fused = jnp.concatenate([params["bm"], params["bs"]]
                              ).reshape(1, n_fused).astype(jnp.float32)

    tm, grid, P_pad = _plan_rows(P, tm)
    pad = P_pad - P
    if pad:
        H = jnp.pad(H, ((0, pad), (0, 0)))
        noise = jnp.pad(noise, ((0, pad), (0, 0)))

    kernel = functools.partial(_vi_norm_kernel, out_dim=out_dim)
    out = pl.pallas_call(
        kernel,
        out_shape=jax.ShapeDtypeStruct((P_pad, n_out), jnp.float32),
        grid=(grid,),
        in_specs=[
            pl.BlockSpec((tm, in_dim), lambda i: (i, 0)),       # H tile
            pl.BlockSpec((tm, out_dim), lambda i: (i, 0)),      # gaussian noise
            pl.BlockSpec((in_dim, n_fused), lambda i: (0, 0)),  # fused W (bf16)
            pl.BlockSpec((1, n_fused), lambda i: (0, 0)),       # fused bias
        ],
        out_specs=pl.BlockSpec((tm, n_out), lambda i: (i, 0)),
        compiler_params=_COMPILER_PARAMS,
    )(H, noise, w_fused, b_fused)

    N = out[:P, :out_dim]
    mean = out[:P, out_dim:2 * out_dim]
    logstd = out[:P, 2 * out_dim:]
    return N, mean, logstd


@functools.partial(jax.jit, static_argnames=("temp", "cat", "tm"))
def vi_forward_both(H, noise, unif, params, *, temp, cat, tm=256):
    P, in_dim = H.shape
    out_dim = params["Wm"].shape[0]
    assert out_dim % cat == 0
    dd = out_dim // cat
    n_fused = 2 * out_dim + cat          # matmul output width (mean | logstd | q)
    n_out = 2 * out_dim + cat + dd       # packed output slab  (mean|logstd|q|M)

    w_fused = jnp.concatenate([params["Wm"].T, params["Ws"].T, params["Wq"].T],
                              axis=1).astype(jnp.bfloat16)        # [in, 2*out+cat]
    b_fused = jnp.concatenate([params["bm"], params["bs"], params["bq"]]
                              ).reshape(1, n_fused).astype(jnp.float32)

    tm, grid, P_pad = _plan_rows(P, tm)
    pad = P_pad - P
    if pad:
        H = jnp.pad(H, ((0, pad), (0, 0)))
        noise = jnp.pad(noise, ((0, pad), (0, 0)))
        unif = jnp.pad(unif, ((0, pad), (0, 0)), constant_values=0.5)

    kernel = functools.partial(_vi_both_kernel, inv_temp=float(1.0 / temp),
                               out_dim=out_dim, cat=cat, dd=dd)
    out = pl.pallas_call(
        kernel,
        out_shape=jax.ShapeDtypeStruct((P_pad, n_out), jnp.float32),
        grid=(grid,),
        in_specs=[
            pl.BlockSpec((tm, in_dim), lambda i: (i, 0)),       # H tile
            pl.BlockSpec((tm, out_dim), lambda i: (i, 0)),      # gaussian noise
            pl.BlockSpec((tm, cat), lambda i: (i, 0)),          # uniform noise
            pl.BlockSpec((in_dim, n_fused), lambda i: (0, 0)),  # fused W (bf16)
            pl.BlockSpec((1, n_fused), lambda i: (0, 0)),       # fused bias
        ],
        out_specs=pl.BlockSpec((tm, n_out), lambda i: (i, 0)),
        compiler_params=_COMPILER_PARAMS,
    )(H, noise, unif, w_fused, b_fused)

    mean = out[:P, :out_dim]
    logstd = out[:P, out_dim:2 * out_dim]
    q = out[:P, 2 * out_dim:2 * out_dim + cat]
    M = out[:P, 2 * out_dim + cat:]
    return M, mean, logstd, q


# ----------------------------------------------------------------------------
# Pure-JAX references (mirror the PyTorch forward; matmuls in bf16 to match the
# kernel's MXU precision, accumulation in f32)
# ----------------------------------------------------------------------------
def _lin_bf16(x, W, b):
    return jnp.dot(x.astype(jnp.bfloat16), W.T.astype(jnp.bfloat16),
                   preferred_element_type=jnp.float32) + b


def _ref_norm(H, noise, params):
    mean = _lin_bf16(H, params["Wm"], params["bm"])
    logstd = _lin_bf16(H, params["Ws"], params["bs"])
    N = noise * jnp.exp(logstd) + mean
    return N, mean, logstd


def _ref_both(H, temp, noise, unif, params, cat):
    mean = _lin_bf16(H, params["Wm"], params["bm"])
    logstd = _lin_bf16(H, params["Ws"], params["bs"])
    q = _lin_bf16(H, params["Wq"], params["bq"])
    N = noise * jnp.exp(logstd) + mean
    Nr = N.reshape(H.shape[0], cat, -1)
    eps = 1e-07
    gumbel = -jnp.log(-jnp.log(unif + eps) + eps)
    Z = jax.nn.softmax((q + gumbel) / temp, axis=-1).reshape(-1, 1, cat)
    M = jnp.squeeze(jnp.matmul(Z, Nr), axis=1)
    return M, mean, logstd, q


# ----------------------------------------------------------------------------
# Main
# ----------------------------------------------------------------------------
if __name__ == "__main__":
    P = 64          # node_pair_num
    in_dim = 32
    out_dim = 32
    cat = 4
    temp = 0.5

    key = jax.random.PRNGKey(0)
    k_h, k_noise, k_unif, k_wm, k_bm, k_ws, k_bs, k_wq, k_bq = jax.random.split(key, 9)

    H = jax.random.normal(k_h, (P, in_dim), jnp.float32)
    noise = jax.random.normal(k_noise, (P, out_dim), jnp.float32)   # torch.randn_like(mean)
    unif = jax.random.uniform(k_unif, (P, cat), jnp.float32)        # torch.rand_like(q)

    # Deterministic parameter init (PyTorch Linear shapes: W [out, in], b [out])
    bound = 1.0 / (in_dim ** 0.5)
    params = {
        "Wm": jax.random.uniform(k_wm, (out_dim, in_dim), jnp.float32, -bound, bound),
        "bm": jax.random.uniform(k_bm, (out_dim,), jnp.float32, -bound, bound),
        "Ws": jax.random.uniform(k_ws, (out_dim, in_dim), jnp.float32, -bound, bound),
        "bs": jax.random.uniform(k_bs, (out_dim,), jnp.float32, -bound, bound),
        "Wq": jax.random.uniform(k_wq, (cat, in_dim), jnp.float32, -bound, bound),
        "bq": jax.random.uniform(k_bq, (cat,), jnp.float32, -bound, bound),
    }

    # distype == 'Both'
    M, mean, logstd, q = vi_forward_both(H, noise, unif, params, temp=temp, cat=cat)
    jax.block_until_ready((M, mean, logstd, q))
    M_r, mean_r, logstd_r, q_r = _ref_both(H, temp, noise, unif, params, cat)
    assert jnp.allclose(mean, mean_r, atol=1e-3, rtol=1e-3)
    assert jnp.allclose(logstd, logstd_r, atol=1e-3, rtol=1e-3)
    assert jnp.allclose(q, q_r, atol=1e-3, rtol=1e-3)
    # M tolerance covers the approx (EUP) reciprocal in the softmax denom.
    assert jnp.allclose(M, M_r, atol=2e-2, rtol=2e-2)

    # distype == 'Norm'
    N, mean2, logstd2 = vi_forward_norm(H, noise, params)
    jax.block_until_ready((N, mean2, logstd2))
    N_r, mean2_r, logstd2_r = _ref_norm(H, noise, params)
    assert jnp.allclose(N, N_r, atol=1e-3, rtol=1e-3)
    assert jnp.allclose(mean2, mean2_r, atol=1e-3, rtol=1e-3)
    assert jnp.allclose(logstd2, logstd2_r, atol=1e-3, rtol=1e-3)

    # Ragged row count (P not divisible by the row tile) — exercises pad/slice path.
    Pr = 50
    Mr2, meanr2, logstdr2, qr2 = vi_forward_both(H[:Pr], noise[:Pr], unif[:Pr],
                                                 params, temp=temp, cat=cat)
    jax.block_until_ready((Mr2, meanr2, logstdr2, qr2))
    Mr2_r, meanr2_r, logstdr2_r, qr2_r = _ref_both(H[:Pr], temp, noise[:Pr],
                                                   unif[:Pr], params, cat)
    assert Mr2.shape == (Pr, out_dim // cat)
    assert jnp.allclose(meanr2, meanr2_r, atol=1e-3, rtol=1e-3)
    assert jnp.allclose(logstdr2, logstdr2_r, atol=1e-3, rtol=1e-3)
    assert jnp.allclose(qr2, qr2_r, atol=1e-3, rtol=1e-3)
    assert jnp.allclose(Mr2, Mr2_r, atol=2e-2, rtol=2e-2)

    print("KERNEL_OK")
</pallas_src>

<mosaic_0001>
module attributes {stable_mosaic.version = 11 : i64} {
  func.func @_vi_both_kernel(%arg0: i32, %arg1: memref<32x32xf32, #tpu.memory_space<vmem>>, %arg2: memref<32x32xf32, #tpu.memory_space<vmem>>, %arg3: memref<32x4xf32, #tpu.memory_space<vmem>>, %arg4: memref<32x68xbf16, #tpu.memory_space<vmem>>, %arg5: memref<1x68xf32, #tpu.memory_space<vmem>>, %arg6: memref<32x76xf32, #tpu.memory_space<vmem>>) attributes {dimension_semantics = [#tpu.dimension_semantics<parallel>], iteration_bounds = array<i64: 2>, scalar_prefetch = 0 : i64, scratch_operands = 0 : i64, tpu.core_type = #tpu.core_type<tc>, window_params = [{transform_indices = @transform_0, window_bounds = array<i64: 32, 32>}, {transform_indices = @transform_1, window_bounds = array<i64: 32, 32>}, {transform_indices = @transform_2, window_bounds = array<i64: 32, 4>}, {pipeline_mode = #tpu.pipeline_mode<synchronous>, transform_indices = @transform_3, window_bounds = array<i64: 32, 68>}, {pipeline_mode = #tpu.pipeline_mode<synchronous>, transform_indices = @transform_4, window_bounds = array<i64: 1, 68>}, {transform_indices = @transform_5, window_bounds = array<i64: 32, 76>}]} {
    %c0 = arith.constant 0 : index
    %c0_0 = arith.constant 0 : index
    %0 = vector.load %arg1[%c0, %c0_0] : memref<32x32xf32, #tpu.memory_space<vmem>>, vector<32x32xf32>
    %1 = arith.truncf %0 : vector<32x32xf32> to vector<32x32xbf16>
    %c0_1 = arith.constant 0 : index
    %c0_2 = arith.constant 0 : index
    %2 = vector.load %arg4[%c0_1, %c0_2] : memref<32x68xbf16, #tpu.memory_space<vmem>>, vector<32x68xbf16>
    %cst = arith.constant dense<0.000000e+00> : vector<32x68xf32>
    %3 = tpu.matmul %1, %2, %cst {dimension_numbers = #tpu.dot_dimension_numbers<[1], [0], [0], [1], [0, 0, 1, 1], [], []>} : vector<32x32xbf16>, vector<32x68xbf16>, vector<32x68xf32> -> vector<32x68xf32>
    %c0_3 = arith.constant 0 : index
    %c0_4 = arith.constant 0 : index
    %4 = vector.load %arg5[%c0_3, %c0_4] : memref<1x68xf32, #tpu.memory_space<vmem>>, vector<1x68xf32>
    %5 = vector.broadcast %4 : vector<1x68xf32> to vector<32x68xf32>
    %6 = arith.addf %3, %5 : vector<32x68xf32>
    %7 = vector.extract_strided_slice %6 {offsets = [0, 0], sizes = [32, 32], strides = [1, 1]} : vector<32x68xf32> to vector<32x32xf32>
    %8 = vector.extract_strided_slice %6 {offsets = [0, 32], sizes = [32, 32], strides = [1, 1]} : vector<32x68xf32> to vector<32x32xf32>
    %9 = vector.extract_strided_slice %6 {offsets = [0, 64], sizes = [32, 4], strides = [1, 1]} : vector<32x68xf32> to vector<32x4xf32>
    %c0_5 = arith.constant 0 : index
    %c0_6 = arith.constant 0 : index
    %10 = vector.load %arg2[%c0_5, %c0_6] : memref<32x32xf32, #tpu.memory_space<vmem>>, vector<32x32xf32>
    %11 = math.exp %8 : vector<32x32xf32>
    %12 = arith.mulf %10, %11 : vector<32x32xf32>
    %13 = arith.addf %12, %7 : vector<32x32xf32>
    %c0_7 = arith.constant 0 : index
    %c0_8 = arith.constant 0 : index
    %14 = vector.load %arg3[%c0_7, %c0_8] : memref<32x4xf32, #tpu.memory_space<vmem>>, vector<32x4xf32>
    %cst_9 = arith.constant 1.000000e-07 : f32
    %15 = vector.broadcast %cst_9 : f32 to vector<32x4xf32>
    %16 = arith.addf %14, %15 : vector<32x4xf32>
    %17 = math.log %16 : vector<32x4xf32>
    %cst_10 = arith.constant 0.000000e+00 : f32
    %18 = vector.broadcast %cst_10 : f32 to vector<32x4xf32>
    %19 = arith.subf %18, %17 : vector<32x4xf32>
    %cst_11 = arith.constant 1.000000e-07 : f32
    %20 = vector.broadcast %cst_11 : f32 to vector<32x4xf32>
    %21 = arith.addf %19, %20 : vector<32x4xf32>
    %22 = math.log %21 : vector<32x4xf32>
    %cst_12 = arith.constant 0.000000e+00 : f32
    %23 = vector.broadcast %cst_12 : f32 to vector<32x4xf32>
    %24 = arith.subf %23, %22 : vector<32x4xf32>
    %25 = arith.addf %9, %24 : vector<32x4xf32>
    %cst_13 = arith.constant 2.000000e+00 : f32
    %26 = vector.broadcast %cst_13 : f32 to vector<32x4xf32>
    %27 = arith.mulf %25, %26 : vector<32x4xf32>
    %cst_14 = arith.constant dense<0xFF800000> : vector<32xf32>
    %28 = vector.multi_reduction <maximumf>, %27, %cst_14 [1] : vector<32x4xf32> to vector<32xf32>
    %29 = vector.shape_cast %28 : vector<32xf32> to vector<32x1xf32>
    %30 = vector.broadcast %29 : vector<32x1xf32> to vector<32x4xf32>
    %31 = arith.subf %27, %30 : vector<32x4xf32>
    %32 = math.exp %31 : vector<32x4xf32>
    %cst_15 = arith.constant dense<0.000000e+00> : vector<32xf32>
    %33 = vector.multi_reduction <add>, %32, %cst_15 [1] : vector<32x4xf32> to vector<32xf32>
    %34 = vector.shape_cast %33 : vector<32xf32> to vector<32x1xf32>
    %35 = tpu.reciprocal %34 {approx = true} : vector<32x1xf32> -> vector<32x1xf32>
    %36 = vector.broadcast %35 : vector<32x1xf32> to vector<32x4xf32>
    %37 = arith.mulf %32, %36 : vector<32x4xf32>
    %cst_16 = arith.constant 0.000000e+00 : f32
    %38 = vector.broadcast %cst_16 : f32 to vector<32x8xf32>
    %39 = vector.extract_strided_slice %37 {offsets = [0, 0], sizes = [32, 1], strides = [1, 1]} : vector<32x4xf32> to vector<32x1xf32>
    %40 = vector.extract_strided_slice %13 {offsets = [0, 0], sizes = [32, 8], strides = [1, 1]} : vector<32x32xf32> to vector<32x8xf32>
    %41 = vector.broadcast %39 : vector<32x1xf32> to vector<32x8xf32>
    %42 = arith.mulf %41, %40 : vector<32x8xf32>
    %43 = arith.addf %38, %42 : vector<32x8xf32>
    %44 = vector.extract_strided_slice %37 {offsets = [0, 1], sizes = [32, 1], strides = [1, 1]} : vector<32x4xf32> to vector<32x1xf32>
    %45 = vector.extract_strided_slice %13 {offsets = [0, 8], sizes = [32, 8], strides = [1, 1]} : vector<32x32xf32> to vector<32x8xf32>
    %46 = vector.broadcast %44 : vector<32x1xf32> to vector<32x8xf32>
    %47 = arith.mulf %46, %45 : vector<32x8xf32>
    %48 = arith.addf %43, %47 : vector<32x8xf32>
    %49 = vector.extract_strided_slice %37 {offsets = [0, 2], sizes = [32, 1], strides = [1, 1]} : vector<32x4xf32> to vector<32x1xf32>
    %50 = vector.extract_strided_slice %13 {offsets = [0, 16], sizes = [32, 8], strides = [1, 1]} : vector<32x32xf32> to vector<32x8xf32>
    %51 = vector.broadcast %49 : vector<32x1xf32> to vector<32x8xf32>
    %52 = arith.mulf %51, %50 : vector<32x8xf32>
    %53 = arith.addf %48, %52 : vector<32x8xf32>
    %54 = vector.extract_strided_slice %37 {offsets = [0, 3], sizes = [32, 1], strides = [1, 1]} : vector<32x4xf32> to vector<32x1xf32>
    %55 = vector.extract_strided_slice %13 {offsets = [0, 24], sizes = [32, 8], strides = [1, 1]} : vector<32x32xf32> to vector<32x8xf32>
    %56 = vector.broadcast %54 : vector<32x1xf32> to vector<32x8xf32>
    %57 = arith.mulf %56, %55 : vector<32x8xf32>
    %58 = arith.addf %53, %57 : vector<32x8xf32>
    %59 = tpu.concatenate %7, %8, %9, %58 in 1 : vector<32x32xf32>, vector<32x32xf32>, vector<32x4xf32>, vector<32x8xf32> -> vector<32x76xf32>
    %c0_17 = arith.constant 0 : index
    %c0_18 = arith.constant 0 : index
    %60 = vector.load %arg6[%c0_17, %c0_18] : memref<32x76xf32, #tpu.memory_space<vmem>>, vector<32x76xf32>
    tpu.vector_store %arg6[%c0_17, %c0_18], %59 {strides = array<i32>} : memref<32x76xf32, #tpu.memory_space<vmem>>, vector<32x76xf32>,
    return
  }
  func.func @transform_0(%arg0: i32) -> (i32, i32) {
    %c0_i32 = arith.constant 0 : i32
    %c0_i32_0 = arith.constant 0 : i32
    return %arg0, %c0_i32 : i32, i32
  }
  func.func @transform_1(%arg0: i32) -> (i32, i32) {
    %c0_i32 = arith.constant 0 : i32
    %c0_i32_0 = arith.constant 0 : i32
    return %arg0, %c0_i32 : i32, i32
  }
  func.func @transform_2(%arg0: i32) -> (i32, i32) {
    %c0_i32 = arith.constant 0 : i32
    %c0_i32_0 = arith.constant 0 : i32
    return %arg0, %c0_i32 : i32, i32
  }
  func.func @transform_3(%arg0: i32) -> (i32, i32) {
    %c0_i32 = arith.constant 0 : i32
    %c0_i32_0 = arith.constant 0 : i32
    %c0_i32_1 = arith.constant 0 : i32
    return %c0_i32, %c0_i32_0 : i32, i32
  }
  func.func @transform_4(%arg0: i32) -> (i32, i32) {
    %c0_i32 = arith.constant 0 : i32
    %c0_i32_0 = arith.constant 0 : i32
    %c0_i32_1 = arith.constant 0 : i32
    return %c0_i32, %c0_i32_0 : i32, i32
  }
  func.func @transform_5(%arg0: i32) -> (i32, i32) {
    %c0_i32 = arith.constant 0 : i32
    %c0_i32_0 = arith.constant 0 : i32
    return %arg0, %c0_i32 : i32, i32
  }
}

</mosaic_0001>

<llo_original>
// kernel: vi_forward_both.1
$region0: #{vi_forward_both.1}
  #allocation0 [shape = 'u32[]', space=smem, size = 0x4, offset = 0x4, fixed_abs, tag = 'smem constant byte address 0x4 - core index']
  #allocation1 [shape = 'u32[72,128]{1,0:T(1,128)}', space=vmem, size = 0x9000, scoped, tag = 'internal scratch']
  %s0 = inlined_call_operand.vmem [shape: f32[64,32], index: 0, kind: input, shape index: {}]
  %s1 = inlined_call_operand.vmem [shape: f32[64,32], index: 1, kind: input, shape index: {}]
  %s2 = inlined_call_operand.vmem [shape: f32[64,4], index: 2, kind: input, shape index: {}]
  %s3 = inlined_call_operand.vmem [shape: bf16[32,68], index: 3, kind: input, shape index: {}]
  %s4 = inlined_call_operand.vmem [shape: f32[1,68], index: 4, kind: input, shape index: {}]
  %s5 = inlined_call_operand.vmem [shape: f32[64,76], index: 5, kind: output, shape index: {}]
  %s6 = sld [smem:[#allocation0]]
  $region53: #{vi_forward_both.1} parent=0
    _
  %s8 = ssub.s32 1, %s6
  %s9 = scalar_select 0, %s8, %s6
  loop: start=0, step=1, limit=4
  $region2: #{vi_forward_both.1} parent=0 // loop_pre_header
    _
  $region3: #{vi_forward_both.1} parent=0 // loop_header
    %s11 = sphi 0, %s15
    %p12 = scmp.ge.s32.totalorder %s11, 4
    %s21 = sphi 0, %s23
    %s24 = sphi 0, %s21
    %s25 = sphi 0, %s24
    %s41 = sphi 0, %s25
    %s47 = sphi 0, %s49
    %s50 = sphi 0, %s47
    %s51 = sphi 0, %s50
    %s67 = sphi 0, %s51
    %s73 = sphi 0, %s75
    %s76 = sphi 0, %s73
    %s77 = sphi 0, %s76
    %s93 = sphi 0, %s77
    %s97 = sphi 0, %s97
    %s99 = sphi 0, %s97
    %s100 = sphi 0, %s99
    %s114 = sphi 0, %s100
    %s118 = sphi 0, %s118
    %s120 = sphi 0, %s118
    %s121 = sphi 0, %s120
    %s135 = sphi 0, %s121
    %s141 = sphi 0, %s143
    %s144 = sphi 0, %s141
    %s145 = sphi 0, %s144
    %s161 = sphi 0, %s145
  $region4: #{vi_forward_both.1} parent=0 // loop_header_branch
    %14 = sbr.rel (%p12) target = $region8
  $region5: #{vi_forward_both.1} parent=0 // loop_body
    %s16 = ssub.s32 %s11, 1
    %s17 = ssub.s32 %s11, 2
    %s18 = sadd.s32 %s11, 1
    %s19 = ssub.s32 %s11, %s18
    %p20 = scmp.eq.s32.totalorder %s19, 0
    %s22 = sadd.s32 %s21, 1
    %s23 = scalar_select %p20, %s21, %s22
    %p26 = pneg %p20
    %p27 = scmp.eq.s32.totalorder %s11, 1
    %p28 = por %p26, %p27
    %p29 = scmp.ne.s32.totalorder %s21, %s24
    %p30 = scmp.eq.s32.totalorder %s11, 0
    %p31 = por %p29, %p30
    %p32 = scmp.ne.s32.totalorder %s21, %s24
    %p33 = scmp.eq.s32.totalorder %s16, 1
    %p34 = por %p32, %p33
    %p35 = scmp.ne.s32.totalorder %s24, %s25
    %p36 = scmp.eq.s32.totalorder %s16, 0
    %p37 = por %p35, %p36
    %p38 = scmp.ne.s32.totalorder %s24, %s25
    %p39 = scmp.eq.s32.totalorder %s17, 1
    %p40 = por %p38, %p39
    %p42 = scmp.ne.s32.totalorder %s25, %s41
    %p43 = scmp.eq.s32.totalorder %s17, 0
    %p44 = por %p42, %p43
    %s45 = ssub.s32 %s11, %s18
    %p46 = scmp.eq.s32.totalorder %s45, 0
    %s48 = sadd.s32 %s47, 1
    %s49 = scalar_select %p46, %s47, %s48
    %p52 = pneg %p46
    %p53 = scmp.eq.s32.totalorder %s11, 1
    %p54 = por %p52, %p53
    %p55 = scmp.ne.s32.totalorder %s47, %s50
    %p56 = scmp.eq.s32.totalorder %s11, 0
    %p57 = por %p55, %p56
    %p58 = scmp.ne.s32.totalorder %s47, %s50
    %p59 = scmp.eq.s32.totalorder %s16, 1
    %p60 = por %p58, %p59
    %p61 = scmp.ne.s32.totalorder %s50, %s51
    %p62 = scmp.eq.s32.totalorder %s16, 0
    %p63 = por %p61, %p62
    %p64 = scmp.ne.s32.totalorder %s50, %s51
    %p65 = scmp.eq.s32.totalorder %s17, 1
    %p66 = por %p64, %p65
    %p68 = scmp.ne.s32.totalorder %s51, %s67
    %p69 = scmp.eq.s32.totalorder %s17, 0
    %p70 = por %p68, %p69
    %s71 = ssub.s32 %s11, %s18
    %p72 = scmp.eq.s32.totalorder %s71, 0
    %s74 = sadd.s32 %s73, 1
    %s75 = scalar_select %p72, %s73, %s74
    %p78 = pneg %p72
    %p79 = scmp.eq.s32.totalorder %s11, 1
    %p80 = por %p78, %p79
    %p81 = scmp.ne.s32.totalorder %s73, %s76
    %p82 = scmp.eq.s32.totalorder %s11, 0
    %p83 = por %p81, %p82
    %p84 = scmp.ne.s32.totalorder %s73, %s76
    %p85 = scmp.eq.s32.totalorder %s16, 1
    %p86 = por %p84, %p85
    %p87 = scmp.ne.s32.totalorder %s76, %s77
    %p88 = scmp.eq.s32.totalorder %s16, 0
    %p89 = por %p87, %p88
    %p90 = scmp.ne.s32.totalorder %s76, %s77
    %p91 = scmp.eq.s32.totalorder %s17, 1
    %p92 = por %p90, %p91
    %p94 = scmp.ne.s32.totalorder %s77, %s93
    %p95 = scmp.eq.s32.totalorder %s17, 0
    %p96 = por %p94, %p95
    %s98 = sadd.s32 %s97, 1
    %p101 = scmp.eq.s32.totalorder %s11, 1
    %p102 = scmp.ne.s32.totalorder %s97, %s99
    %p103 = scmp.eq.s32.totalorder %s11, 0
    %p104 = por %p102, %p103
    %p105 = scmp.ne.s32.totalorder %s97, %s99
    %p106 = scmp.eq.s32.totalorder %s16, 1
    %p107 = por %p105, %p106
    %p108 = scmp.ne.s32.totalorder %s99, %s100
    %p109 = scmp.eq.s32.totalorder %s16, 0
    %p110 = por %p108, %p109
    %p111 = scmp.ne.s32.totalorder %s99, %s100
    %p112 = scmp.eq.s32.totalorder %s17, 1
    %p113 = por %p111, %p112
    %p115 = scmp.ne.s32.totalorder %s100, %s114
    %p116 = scmp.eq.s32.totalorder %s17, 0
    %p117 = por %p115, %p116
    %s119 = sadd.s32 %s118, 1
    %p122 = scmp.eq.s32.totalorder %s11, 1
    %p123 = scmp.ne.s32.totalorder %s118, %s120
    %p124 = scmp.eq.s32.totalorder %s11, 0
    %p125 = por %p123, %p124
    %p126 = scmp.ne.s32.totalorder %s118, %s120
    %p127 = scmp.eq.s32.totalorder %s16, 1
    %p128 = por %p126, %p127
    %p129 = scmp.ne.s32.totalorder %s120, %s121
    %p130 = scmp.eq.s32.totalorder %s16, 0
    %p131 = por %p129, %p130
    %p132 = scmp.ne.s32.totalorder %s120, %s121
    %p133 = scmp.eq.s32.totalorder %s17, 1
    %p134 = por %p132, %p133
    %p136 = scmp.ne.s32.totalorder %s121, %s135
    %p137 = scmp.eq.s32.totalorder %s17, 0
    %p138 = por %p136, %p137
    %s139 = ssub.s32 %s11, %s18
    %p140 = scmp.eq.s32.totalorder %s139, 0
    %s142 = sadd.s32 %s141, 1
    %s143 = scalar_select %p140, %s141, %s142
    %p146 = pneg %p140
    %p147 = scmp.eq.s32.totalorder %s11, 1
    %p148 = por %p146, %p147
    %p149 = scmp.ne.s32.totalorder %s141, %s144
    %p150 = scmp.eq.s32.totalorder %s11, 0
    %p151 = por %p149, %p150
    %p152 = scmp.ne.s32.totalorder %s141, %s144
    %p153 = scmp.eq.s32.totalorder %s16, 1
    %p154 = por %p152, %p153
    %p155 = scmp.ne.s32.totalorder %s144, %s145
    %p156 = scmp.eq.s32.totalorder %s16, 0
    %p157 = por %p155, %p156
    %p158 = scmp.ne.s32.totalorder %s144, %s145
    %p159 = scmp.eq.s32.totalorder %s17, 1
    %p160 = por %p158, %p159
    %p162 = scmp.ne.s32.totalorder %s145, %s161
    %p163 = scmp.eq.s32.totalorder %s17, 0
    %p164 = por %p162, %p163
    %p165 = scmp.le.s32.totalorder 1, %s11
    %p166 = scmp.lt.s32.totalorder %s11, 3
    %p167 = pnand %p165, %p166
    %p168 = pneg %p167
    // Predicated region
    $region9: #{vi_forward_both.1} parent=5 // pred_check
      _
    $region10: #{vi_forward_both.1} parent=5 // pred_check_branch
      %170 = sbr.rel (%p167) target = $region12
    $region11: #{vi_forward_both.1} parent=5 // pred_region
      %s171 = ssub.s32 %s11, 1
      // Predicated region
      $region13: #{vi_forward_both.1} parent=11 // pred_check
        %p172 = pneg %p110
      $region14: #{vi_forward_both.1} parent=11 // pred_check_branch
        %174 = sbr.rel (%p172) target = $region16
      $region15: #{vi_forward_both.1} parent=11 // pred_region
        _
      $region16: #{vi_forward_both.1} parent=11 // pred_fallthru
        _
      // Predicated region
      $region17: #{vi_forward_both.1} parent=11 // pred_check
        %p175 = pneg %p131
      $region18: #{vi_forward_both.1} parent=11 // pred_check_branch
        %177 = sbr.rel (%p175) target = $region20
      $region19: #{vi_forward_both.1} parent=11 // pred_region
        _
      $region20: #{vi_forward_both.1} parent=11 // pred_fallthru
        _
    $region12: #{vi_forward_both.1} parent=5 // pred_fallthru
      _
    %p178 = scmp.lt.s32.totalorder %s11, 2
    // Predicated region
    $region21: #{vi_forward_both.1} parent=5 // pred_check
      %p179 = pneg %p178
    $region22: #{vi_forward_both.1} parent=5 // pred_check_branch
      %181 = sbr.rel (%p179) target = $region24
    $region23: #{vi_forward_both.1} parent=5 // pred_region
      // Predicated region
      $region25: #{vi_forward_both.1} parent=23 // pred_check
        %p182 = pneg %p31
      $region26: #{vi_forward_both.1} parent=23 // pred_check_branch
        %184 = sbr.rel (%p182) target = $region28
      $region27: #{vi_forward_both.1} parent=23 // pred_region
        %s185 = smul.u32 4, %s11
        %p186 = scmp.lt.s32.totalorder %s185, 7
        %s187 = scalar_select %p186, %s185, 7
        %s188 = smul.addr %s187, 8
        %s189 = scalar_lea.vmem %s0, %s188
        %s190 = smul.u32 4, %s11
      $region28: #{vi_forward_both.1} parent=23 // pred_fallthru
        _
      // Predicated region
      $region29: #{vi_forward_both.1} parent=23 // pred_check
        %p191 = pneg %p57
      $region30: #{vi_forward_both.1} parent=23 // pred_check_branch
        %193 = sbr.rel (%p191) target = $region32
      $region31: #{vi_forward_both.1} parent=23 // pred_region
        %s194 = smul.u32 4, %s11
        %p195 = scmp.lt.s32.totalorder %s194, 7
        %s196 = scalar_select %p195, %s194, 7
        %s197 = smul.addr %s196, 8
        %s198 = scalar_lea.vmem %s1, %s197
        %s199 = smul.u32 4, %s11
      $region32: #{vi_forward_both.1} parent=23 // pred_fallthru
        _
      // Predicated region
      $region33: #{vi_forward_both.1} parent=23 // pred_check
        %p200 = pneg %p83
      $region34: #{vi_forward_both.1} parent=23 // pred_check_branch
        %202 = sbr.rel (%p200) target = $region36
      $region35: #{vi_forward_both.1} parent=23 // pred_region
        %s203 = smul.u32 4, %s11
        %p204 = scmp.lt.s32.totalorder %s203, 7
        %s205 = scalar_select %p204, %s203, 7
        %s206 = smul.addr %s205, 8
        %s207 = scalar_lea.vmem %s2, %s206
        %s208 = smul.u32 4, %s11
      $region36: #{vi_forward_both.1} parent=23 // pred_fallthru
        _
    $region24: #{vi_forward_both.1} parent=5 // pred_fallthru
      _
    %p209 = scmp.le.s32.totalorder 1, %s11
    %p210 = scmp.lt.s32.totalorder %s11, 3
    %p211 = pnand %p209, %p210
    %p212 = pneg %p211
    // Predicated region
    $region37: #{vi_forward_both.1} parent=5 // pred_check
      _
    $region38: #{vi_forward_both.1} parent=5 // pred_check_branch
      %214 = sbr.rel (%p211) target = $region40
    $region39: #{vi_forward_both.1} parent=5 // pred_region
      %s215 = ssub.s32 %s11, 1
      %s216 = smul.u32 4, %s16
      %p217 = scmp.lt.s32.totalorder %s216, 7
      %s218 = scalar_select %p217, %s216, 7
      %s219 = smul.addr %s218, 8
      %s220 = scalar_lea.vmem %s0, %s219
      %p221 = pneg %p37
      %p222 = pneg %p34
      %s223 = smul.u32 4, %s16
      %p224 = scmp.lt.s32.totalorder %s223, 7
      %s225 = scalar_select %p224, %s223, 7
      %s226 = smul.addr %s225, 8
      %s227 = scalar_lea.vmem %s1, %s226
      %p228 = pneg %p63
      %p229 = pneg %p60
      %s230 = smul.u32 4, %s16
      %p231 = scmp.lt.s32.totalorder %s230, 7
      %s232 = scalar_select %p231, %s230, 7
      %s233 = smul.addr %s232, 8
      %s234 = scalar_lea.vmem %s2, %s233
      %p235 = pneg %p89
      %p236 = pneg %p86
      %p237 = pneg %p110
      %p238 = pneg %p107
      %p239 = pneg %p131
      %p240 = pneg %p128
      %p241 = pneg %p157
      %p242 = pneg %p154
      %s243 = smul.u32 4, %s16
      %p244 = scmp.lt.s32.totalorder %s243, 7
      %s245 = scalar_select %p244, %s243, 7
      %s246 = smul.addr %s245, 8
      %s247 = scalar_lea.vmem %s5, %s246
      %s248 = smul.u32 4, %s16
      %p249 = scmp.lt.s32.totalorder %s248, 7
      %s250 = scalar_select %p249, %s248, 7
      %s251 = smul.addr %s250, 8
      %s252 = scalar_lea.vmem %s0, %s251
      %s253 = smul.u32 4, %s16
      %s254 = smul.u32 4, %s16
      %p255 = scmp.lt.s32.totalorder %s254, 7
      %s256 = scalar_select %p255, %s254, 7
      %s257 = smul.addr %s256, 8
      %s258 = scalar_lea.vmem %s1, %s257
      %s259 = smul.u32 4, %s16
      %s260 = smul.u32 4, %s16
      %p261 = scmp.lt.s32.totalorder %s260, 7
      %s262 = scalar_select %p261, %s260, 7
      %s263 = smul.addr %s262, 8
      %s264 = scalar_lea.vmem %s2, %s263
      %s265 = smul.u32 4, %s16
      %s266 = smul.u32 4, %s16
      %p267 = scmp.lt.s32.totalorder %s266, 7
      %s268 = scalar_select %p267, %s266, 7
      %s269 = smul.addr %s268, 8
      %s270 = scalar_lea.vmem %s5, %s269
      %s271 = smul.u32 4, %s16
      %v273 = vld [vmem:[%s252] sm:$0xff]
      %v274 = vld [vmem:[%s252 + $0x8] sm:$0xff]
      %v275 = vld [vmem:[%s252 + $0x10] sm:$0xff]
      %v276 = vld [vmem:[%s252 + $0x18] sm:$0xff]
      %v277 = vpack.c.bf16 %v274, %v273
      %v278 = vpack.c.bf16 %v276, %v275
      %v279 = vld [vmem:[%s3] sm:$0xf]
      %v280 = vld [vmem:[%s3 + $0x4] sm:$0xf]
      %v281 = vld [vmem:[%s3 + $0x8] sm:$0xf]
      %v282 = vld [vmem:[%s3 + $0xc] sm:$0xf]
      %v283 = vld [vmem:[%s4] sm:$0x1]
      %v285 = vperm.slane %v283, 0
      %v291 = vunpack.c.l.b16 %v279
      %v292 = vunpack.c.l.b16 %v280
      %v293 = vunpack.c.l.b16 %v281
      %v294 = vunpack.c.l.b16 %v282
      %v295 = vpack.c.b16 %v292, %v291
      %v296 = vpack.c.b16 %v294, %v293
      %vm299 = vcmask 261120
      %v301 = vsel %vm299, %v277, 0
      %v304 = vsel %vm299, %v278, 0
      %306 = vmatpush.bf16.msra.mxu0 0
      %307 = vmatpush.bf16.msra.mxu0 0
      %308 = vmatpush.bf16.msra.mxu0 0
      %309 = vmatpush.bf16.msra.mxu0 0
      %310 = vmatpush.bf16.msra.mxu0 0
      %311 = vmatpush.bf16.msra.mxu0 0
      %312 = vmatpush.bf16.msra.mxu0 %v296
      %313 = vmatpush.bf16.msra.mxu0 %v295
      %314 = vmatmul.bf16.gmra.mxu0 %v301
      %v315 = vpop.f32.mrf.mxu0
      %v316 = vadd.f32 %v285, %v315
      %v317 = vpop.f32.mrf.mxu0
      %v318 = vadd.f32 %v285, %v317
      %319 = vmatmul.bf16.gmra.mxu0 %v304
      %v320 = vpop.f32.mrf.mxu0
      %v321 = vadd.f32 %v285, %v320
      %v322 = vpop.f32.mrf.mxu0
      %v323 = vadd.f32 %v285, %v322
      %324 = vdwg.mxu0
      %v325 = vld [vmem:[%s258] sm:$0xff]
      %v326 = vld [vmem:[%s258 + $0x8] sm:$0xff]
      %v327 = vld [vmem:[%s258 + $0x10] sm:$0xff]
      %v328 = vld [vmem:[%s258 + $0x18] sm:$0xff]
      %v329 = vmul.f32 %v316, 1.442695
      %v330 = vpow.pop %v329
      %v331 = vmul.f32 %v318, 1.442695
      %v332 = vpow.pop %v331
      %v333 = vmul.f32 %v321, 1.442695
      %v334 = vpow.pop %v333
      %v335 = vmul.f32 %v323, 1.442695
      %v336 = vpow.pop %v335
      %341 = vrot.lane.b32.xlu0 %v330, 96
      %v342 = vpop.permute.xlu0 %341
      %343 = vrot.lane.b32.xlu0 %v332, 96
      %v344 = vpop.permute.xlu0 %343
      %345 = vrot.lane.b32.xlu0 %v334, 96
      %v346 = vpop.permute.xlu0 %345
      %347 = vrot.lane.b32.xlu0 %v336, 96
      %v348 = vpop.permute.xlu0 %347
      %v353 = vmul.f32 %v325, %v342
      %v354 = vmul.f32 %v326, %v344
      %v355 = vmul.f32 %v327, %v346
      %v356 = vmul.f32 %v328, %v348
      %v357 = vadd.f32 %v353, %v316
      %v358 = vadd.f32 %v354, %v318
      %v359 = vadd.f32 %v355, %v321
      %v360 = vadd.f32 %v356, %v323
      %v361 = vld [vmem:[%s264] sm:$0xff]
      %v362 = vld [vmem:[%s264 + $0x8] sm:$0xff]
      %v363 = vld [vmem:[%s264 + $0x10] sm:$0xff]
      %v364 = vld [vmem:[%s264 + $0x18] sm:$0xff]
      %v365 = vadd.f32 %v361, 1e-07
      %v366 = vadd.f32 %v362, 1e-07
      %v367 = vadd.f32 %v363, 1e-07
      %v368 = vadd.f32 %v364, 1e-07
      %v369 = vlog2.pop %v365
      %v370 = vmul.f32 %v369, 0.6931472
      %v371 = vlog2.pop %v366
      %v372 = vmul.f32 %v371, 0.6931472
      %v373 = vlog2.pop %v367
      %v374 = vmul.f32 %v373, 0.6931472
      %v375 = vlog2.pop %v368
      %v376 = vmul.f32 %v375, 0.6931472
      %v377 = vsub.f32 0.0, %v370
      %v378 = vsub.f32 0.0, %v372
      %v379 = vsub.f32 0.0, %v374
      %v380 = vsub.f32 0.0, %v376
      %v381 = vadd.f32 %v377, 1e-07
      %v382 = vadd.f32 %v378, 1e-07
      %v383 = vadd.f32 %v379, 1e-07
      %v384 = vadd.f32 %v380, 1e-07
      %v385 = vlog2.pop %v381
      %v386 = vmul.f32 %v385, 0.6931472
      %v387 = vlog2.pop %v382
      %v388 = vmul.f32 %v387, 0.6931472
      %v389 = vlog2.pop %v383
      %v390 = vmul.f32 %v389, 0.6931472
      %v391 = vlog2.pop %v384
      %v392 = vmul.f32 %v391, 0.6931472
      %v393 = vsub.f32 0.0, %v386
      %v394 = vsub.f32 0.0, %v388
      %v395 = vsub.f32 0.0, %v390
      %v396 = vsub.f32 0.0, %v392
      %401 = vrot.lane.b32.xlu0 %v393, 64
      %v402 = vpop.permute.xlu0 %401
      %403 = vrot.lane.b32.xlu0 %v394, 64
      %v404 = vpop.permute.xlu0 %403
      %405 = vrot.lane.b32.xlu0 %v395, 64
      %v406 = vpop.permute.xlu0 %405
      %407 = vrot.lane.b32.xlu0 %v396, 64
      %v408 = vpop.permute.xlu0 %407
      %v413 = vadd.f32 %v316, %v402
      %v414 = vadd.f32 %v318, %v404
      %v415 = vadd.f32 %v321, %v406
      %v416 = vadd.f32 %v323, %v408
      %v417 = vmul.f32 %v413, 2.0
      %v418 = vmul.f32 %v414, 2.0
      %v419 = vmul.f32 %v415, 2.0
      %v420 = vmul.f32 %v416, 2.0
      %vm421 = vcmask 556544
      %v422 = vsel %vm421, %v417, -inf
      %423 = vmax.xlane.f32.xlu0 %v422
      %v424 = vpop.xlane.xlu0 %423
      %v425 = vsel %vm421, %v418, -inf
      %426 = vmax.xlane.f32.xlu0 %v425
      %v427 = vpop.xlane.xlu0 %426
      %v428 = vsel %vm421, %v419, -inf
      %429 = vmax.xlane.f32.xlu0 %v428
      %v430 = vpop.xlane.xlu0 %429
      %v431 = vsel %vm421, %v420, -inf
      %432 = vmax.xlane.f32.xlu0 %v431
      %v433 = vpop.xlane.xlu0 %432
      %v434 = vsub.f32 %v417, %v424
      %v435 = vsub.f32 %v418, %v427
      %v436 = vsub.f32 %v419, %v430
      %v437 = vsub.f32 %v420, %v433
      %v438 = vmul.f32 %v434, 1.442695
      %v439 = vpow.pop %v438
      %v440 = vmul.f32 %v435, 1.442695
      %v441 = vpow.pop %v440
      %v442 = vmul.f32 %v436, 1.442695
      %v443 = vpow.pop %v442
      %v444 = vmul.f32 %v437, 1.442695
      %v445 = vpow.pop %v444
      %450 = vrot.lane.b32.xlu0 %v439, 64
      %v451 = vpop.permute.xlu0 %450
      %452 = vrot.lane.b32.xlu0 %v441, 64
      %v453 = vpop.permute.xlu0 %452
      %454 = vrot.lane.b32.xlu0 %v443, 64
      %v455 = vpop.permute.xlu0 %454
      %456 = vrot.lane.b32.xlu0 %v445, 64
      %v457 = vpop.permute.xlu0 %456
      %vm462 = vcmask 31744
      %v463 = vsel %vm462, %v451, 0.0
      %464 = vadd.xlane.f32.xlu0 %v463
      %v465 = vpop.xlane.xlu0 %464
      %v466 = vsel %vm462, %v453, 0.0
      %467 = vadd.xlane.f32.xlu0 %v466
      %v468 = vpop.xlane.xlu0 %467
      %v469 = vsel %vm462, %v455, 0.0
      %470 = vadd.xlane.f32.xlu0 %v469
      %v471 = vpop.xlane.xlu0 %470
      %v472 = vsel %vm462, %v457, 0.0
      %473 = vadd.xlane.f32.xlu0 %v472
      %v474 = vpop.xlane.xlu0 %473
      %v475 = vrcp.pop %v465
      %v476 = vrcp.pop %v468
      %v477 = vrcp.pop %v471
      %v478 = vrcp.pop %v474
      %v479 = vmul.f32 %v439, %v475
      %v480 = vmul.f32 %v441, %v476
      %v481 = vmul.f32 %v443, %v477
      %v482 = vmul.f32 %v445, %v478
      %484 = vset.pattern.permute.xlu0 64
      %485 = vperm.xlu0 %484, %v479
      %v486 = vpop.permute.xlu0 %485
      %489 = vset.pattern.permute.xlu0 64
      %490 = vperm.xlu0 %489, %v480
      %v491 = vpop.permute.xlu0 %490
      %494 = vset.pattern.permute.xlu0 64
      %495 = vperm.xlu0 %494, %v481
      %v496 = vpop.permute.xlu0 %495
      %499 = vset.pattern.permute.xlu0 64
      %500 = vperm.xlu0 %499, %v482
      %v501 = vpop.permute.xlu0 %500
      %v503 = vmul.f32 %v486, %v357
      %v504 = vmul.f32 %v491, %v358
      %v505 = vmul.f32 %v496, %v359
      %v506 = vmul.f32 %v501, %v360
      %v507 = vadd.f32 %v503, 0.0
      %v508 = vadd.f32 %v504, 0.0
      %v509 = vadd.f32 %v505, 0.0
      %v510 = vadd.f32 %v506, 0.0
      %511 = vset.pattern.permute.xlu0 65
      %512 = vperm.xlu0 %511, %v479
      %v513 = vpop.permute.xlu0 %512
      %515 = vset.pattern.permute.xlu0 65
      %516 = vperm.xlu0 %515, %v480
      %v517 = vpop.permute.xlu0 %516
      %519 = vset.pattern.permute.xlu0 65
      %520 = vperm.xlu0 %519, %v481
      %v521 = vpop.permute.xlu0 %520
      %523 = vset.pattern.permute.xlu0 65
      %524 = vperm.xlu0 %523, %v482
      %v525 = vpop.permute.xlu0 %524
      %v527 = vmul.f32 %v513, %v357
      %v528 = vmul.f32 %v517, %v358
      %v529 = vmul.f32 %v521, %v359
      %v530 = vmul.f32 %v525, %v360
      %535 = vrot.lane.b32.xlu0 %v527, 120
      %v536 = vpop.permute.xlu0 %535
      %537 = vrot.lane.b32.xlu0 %v528, 120
      %v538 = vpop.permute.xlu0 %537
      %539 = vrot.lane.b32.xlu0 %v529, 120
      %v540 = vpop.permute.xlu0 %539
      %541 = vrot.lane.b32.xlu0 %v530, 120
      %v542 = vpop.permute.xlu0 %541
      %v547 = vadd.f32 %v507, %v536
      %v548 = vadd.f32 %v508, %v538
      %v549 = vadd.f32 %v509, %v540
      %v550 = vadd.f32 %v510, %v542
      %551 = vset.pattern.permute.xlu0 66
      %552 = vperm.xlu0 %551, %v479
      %v553 = vpop.permute.xlu0 %552
      %555 = vset.pattern.permute.xlu0 66
      %556 = vperm.xlu0 %555, %v480
      %v557 = vpop.permute.xlu0 %556
      %559 = vset.pattern.permute.xlu0 66
      %560 = vperm.xlu0 %559, %v481
      %v561 = vpop.permute.xlu0 %560
      %563 = vset.pattern.permute.xlu0 66
      %564 = vperm.xlu0 %563, %v482
      %v565 = vpop.permute.xlu0 %564
      %v567 = vmul.f32 %v553, %v357
      %v568 = vmul.f32 %v557, %v358
      %v569 = vmul.f32 %v561, %v359
      %v570 = vmul.f32 %v565, %v360
      %575 = vrot.lane.b32.xlu0 %v567, 112
      %v576 = vpop.permute.xlu0 %575
      %577 = vrot.lane.b32.xlu0 %v568, 112
      %v578 = vpop.permute.xlu0 %577
      %579 = vrot.lane.b32.xlu0 %v569, 112
      %v580 = vpop.permute.xlu0 %579
      %581 = vrot.lane.b32.xlu0 %v570, 112
      %v582 = vpop.permute.xlu0 %581
      %v587 = vadd.f32 %v547, %v576
      %v588 = vadd.f32 %v548, %v578
      %v589 = vadd.f32 %v549, %v580
      %v590 = vadd.f32 %v550, %v582
      %591 = vset.pattern.permute.xlu0 67
      %592 = vperm.xlu0 %591, %v479
      %v593 = vpop.permute.xlu0 %592
      %595 = vset.pattern.permute.xlu0 67
      %596 = vperm.xlu0 %595, %v480
      %v597 = vpop.permute.xlu0 %596
      %599 = vset.pattern.permute.xlu0 67
      %600 = vperm.xlu0 %599, %v481
      %v601 = vpop.permute.xlu0 %600
      %603 = vset.pattern.permute.xlu0 67
      %604 = vperm.xlu0 %603, %v482
      %v605 = vpop.permute.xlu0 %604
      %v607 = vmul.f32 %v593, %v357
      %v608 = vmul.f32 %v597, %v358
      %v609 = vmul.f32 %v601, %v359
      %v610 = vmul.f32 %v605, %v360
      %615 = vrot.lane.b32.xlu0 %v607, 104
      %v616 = vpop.permute.xlu0 %615
      %617 = vrot.lane.b32.xlu0 %v608, 104
      %v618 = vpop.permute.xlu0 %617
      %619 = vrot.lane.b32.xlu0 %v609, 104
      %v620 = vpop.permute.xlu0 %619
      %621 = vrot.lane.b32.xlu0 %v610, 104
      %v622 = vpop.permute.xlu0 %621
      %v627 = vadd.f32 %v587, %v616
      %v628 = vadd.f32 %v588, %v618
      %v629 = vadd.f32 %v589, %v620
      %v630 = vadd.f32 %v590, %v622
      %635 = vrot.lane.b32.xlu0 %v627, 68
      %v636 = vpop.permute.xlu0 %635
      %637 = vrot.lane.b32.xlu0 %v628, 68
      %v638 = vpop.permute.xlu0 %637
      %639 = vrot.lane.b32.xlu0 %v629, 68
      %v640 = vpop.permute.xlu0 %639
      %641 = vrot.lane.b32.xlu0 %v630, 68
      %v642 = vpop.permute.xlu0 %641
      %vm647 = vcmask 556032
      %v648 = vsel %vm647, %v316, %v636
      %v649 = vsel %vm647, %v318, %v638
      %v650 = vsel %vm647, %v321, %v640
      %v651 = vsel %vm647, %v323, %v642
      %vm652 = vcmask 621568
      %653 = vst.msk [vmem:[%s270] sm:$0xff] %vm652, %v648
      %654 = vst.msk [vmem:[%s270 + $0x8] sm:$0xff] %vm652, %v649
      %655 = vst.msk [vmem:[%s270 + $0x10] sm:$0xff] %vm652, %v650
      %656 = vst.msk [vmem:[%s270 + $0x18] sm:$0xff] %vm652, %v651
      %s657 = smul.u32 4, %s16
      %p658 = scmp.lt.s32.totalorder %s657, 7
      %s659 = scalar_select %p658, %s657, 7
      %s660 = smul.addr %s659, 8
      %s661 = scalar_lea.vmem %s5, %s660
      // Predicated region
      $region41: #{vi_forward_both.1} parent=39 // pred_check
        %p662 = pneg %p154
      $region42: #{vi_forward_both.1} parent=39 // pred_check_branch
        %664 = sbr.rel (%p662) target = $region44
      $region43: #{vi_forward_both.1} parent=39 // pred_region
        %s665 = smul.u32 4, %s16
      $region44: #{vi_forward_both.1} parent=39 // pred_fallthru
        _
    $region40: #{vi_forward_both.1} parent=5 // pred_fallthru
      _
    %p666 = scmp.le.s32.totalorder 2, %s11
    // Predicated region
    $region45: #{vi_forward_both.1} parent=5 // pred_check
      %p667 = pneg %p666
    $region46: #{vi_forward_both.1} parent=5 // pred_check_branch
      %669 = sbr.rel (%p667) target = $region48
    $region47: #{vi_forward_both.1} parent=5 // pred_region
      %s670 = ssub.s32 %s11, 2
      // Predicated region
      $region49: #{vi_forward_both.1} parent=47 // pred_check
        %p671 = pneg %p160
      $region50: #{vi_forward_both.1} parent=47 // pred_check_branch
        %673 = sbr.rel (%p671) target = $region52
      $region51: #{vi_forward_both.1} parent=47 // pred_region
        %s674 = smul.u32 4, %s17
        %p675 = scmp.lt.s32.totalorder %s674, 7
        %s676 = scalar_select %p675, %s674, 7
        %s677 = smul.addr %s676, 8
        %s678 = scalar_lea.vmem %s5, %s677
      $region52: #{vi_forward_both.1} parent=47 // pred_fallthru
        _
    $region48: #{vi_forward_both.1} parent=5 // pred_fallthru
      _
  $region6: #{vi_forward_both.1} parent=0 // loop_footer
    %s15 = sadd.s32 1, %s11
  $region7: #{vi_forward_both.1} parent=0 // loop_footer_branch
    %10 = sbr.rel target = $region3
  $region8: #{vi_forward_both.1} parent=0 // loop_exit
    _

</llo_original>
